<compile_context>
chip_gen: v5e
topology: v5e:2x2
jax: 0.10.0
libtpu: 0.0.40
codegen_flags: <defaults>
</compile_context>

<pallas_src>
import jax
import jax.numpy as jnp
from jax.experimental import pallas as pl
from jax.experimental.pallas import tpu as pltpu

HIDDEN = 32


def mlp_kernel(x_ref, w1_ref, b1_ref, w2_ref, b2_ref, o_ref):
    # fc1 on the MXU (bf16 inputs, f32 accumulation), bias + ReLU on the VPU.
    h = jnp.dot(x_ref[...], w1_ref[...], preferred_element_type=jnp.float32)
    h = jnp.maximum(h + b1_ref[...], 0.0)                      # (TB, 32)
    # fc2: N=1 output lane -> VPU multiply + lane reduction instead of MXU.
    o = jnp.sum(h * w2_ref[...], axis=-1, keepdims=True) + b2_ref[...]
    o_ref[...] = o.astype(o_ref.dtype)                          # (TB, 1)


def _round_up(n, m):
    return ((n + m - 1) // m) * m


def net_forward(x, w1, b1, w2, b2, *, block_b=1024):
    """relu(x @ w1 + b1) @ w2 + b2  (same semantics as the PyTorch Net).

    x: (B, D); w1: (D, 32); b1: (1, 32); w2: (32, 1); b2: (1, 1).
    Weights are stored transposed relative to PyTorch (in, out) layout.
    """
    B, D = x.shape
    H = w1.shape[1]

    # bf16 activations/weights for the MXU matmul; f32 everywhere else.
    x_bf = x.astype(jnp.bfloat16)
    w1_bf = w1.astype(jnp.bfloat16)
    b1_f = b1.astype(jnp.float32).reshape(1, H)
    w2_row = w2.astype(jnp.float32).reshape(1, H)   # (32,1) column -> (1,32) row
    b2_f = b2.astype(jnp.float32).reshape(1, 1)

    # Batch tile: multiple of 8 (sublane granularity), capped so the
    # double-buffered x tile stays well under the scoped-VMEM default on all
    # of v5e (16 MiB) / v6e (32 MiB) / v7x (32 MiB of 64 MiB physical).
    tb = min(block_b, _round_up(B, 8))
    b_pad = _round_up(B, tb)
    if b_pad != B:
        x_bf = jnp.pad(x_bf, ((0, b_pad - B), (0, 0)))

    grid = (pl.cdiv(b_pad, tb),)

    out = pl.pallas_call(
        mlp_kernel,
        out_shape=jax.ShapeDtypeStruct((b_pad, 1), jnp.float32),
        grid=grid,
        in_specs=[
            pl.BlockSpec((tb, D), lambda i: (i, 0)),   # x: streamed batch tiles
            pl.BlockSpec((D, H), lambda i: (0, 0)),    # w1: VMEM-resident
            pl.BlockSpec((1, H), lambda i: (0, 0)),    # b1: VMEM-resident
            pl.BlockSpec((1, H), lambda i: (0, 0)),    # w2 row: VMEM-resident
            pl.BlockSpec((1, 1), lambda i: (0, 0)),    # b2: VMEM-resident
        ],
        out_specs=pl.BlockSpec((tb, 1), lambda i: (i, 0)),
        compiler_params=pltpu.CompilerParams(
            dimension_semantics=("parallel",),         # megacore-shard batch on v7x
        ),
    )(x_bf, w1_bf, b1_f, w2_row, b2_f)

    return out[:B]


def reference_forward(x, w1, b1, w2, b2):
    h = jnp.maximum(x @ w1 + b1, 0.0)
    return h @ w2 + b2


if __name__ == "__main__":
    key = jax.random.PRNGKey(0)
    k_x, k_w1, k_b1, k_w2, k_b2, k_x2 = jax.random.split(key, 6)

    batch = 8
    input_size = 16
    hidden = HIDDEN

    # Deterministic synthetic parameters (not a checkpoint).
    x = jax.random.normal(k_x, (batch, input_size), dtype=jnp.float32)
    w1 = jax.random.normal(k_w1, (input_size, hidden), dtype=jnp.float32) * 0.1
    b1 = jax.random.normal(k_b1, (1, hidden), dtype=jnp.float32) * 0.1
    w2 = jax.random.normal(k_w2, (hidden, 1), dtype=jnp.float32) * 0.1
    b2 = jax.random.normal(k_b2, (1, 1), dtype=jnp.float32) * 0.1

    # bf16-consistent reference (same input rounding as the kernel).
    def ref_bf16(xx):
        return reference_forward(
            xx.astype(jnp.bfloat16).astype(jnp.float32),
            w1.astype(jnp.bfloat16).astype(jnp.float32), b1, w2, b2)

    # Case 1: the literal module-sized problem (single grid step).
    out = jax.block_until_ready(net_forward(x, w1, b1, w2, b2))
    assert out.shape == (batch, 1), out.shape
    assert jnp.allclose(out, ref_bf16(x), atol=1e-4, rtol=1e-4)
    # Loose check against the full-f32 reference (bf16 input rounding only).
    assert jnp.allclose(out, reference_forward(x, w1, b1, w2, b2),
                        atol=5e-2, rtol=5e-2)

    # Case 2: batch not a multiple of the tile, multiple grid steps
    # (exercises padding, batch streaming, and the parallel grid axis).
    batch2 = 300
    x2 = jax.random.normal(k_x2, (batch2, input_size), dtype=jnp.float32)
    out2 = jax.block_until_ready(net_forward(x2, w1, b1, w2, b2, block_b=128))
    assert out2.shape == (batch2, 1), out2.shape
    assert jnp.allclose(out2, ref_bf16(x2), atol=1e-4, rtol=1e-4)

    print("KERNEL_OK")
</pallas_src>

<mosaic_0001>
module attributes {stable_mosaic.version = 11 : i64} {
  func.func @mlp_kernel(%arg0: i32, %arg1: memref<8x16xbf16, #tpu.memory_space<vmem>>, %arg2: memref<16x32xbf16, #tpu.memory_space<vmem>>, %arg3: memref<1x32xf32, #tpu.memory_space<vmem>>, %arg4: memref<1x32xf32, #tpu.memory_space<vmem>>, %arg5: memref<1x1xf32, #tpu.memory_space<vmem>>, %arg6: memref<8x1xf32, #tpu.memory_space<vmem>>) attributes {dimension_semantics = [#tpu.dimension_semantics<parallel>], iteration_bounds = array<i64: 1>, scalar_prefetch = 0 : i64, scratch_operands = 0 : i64, tpu.core_type = #tpu.core_type<tc>, window_params = [{transform_indices = @transform_0, window_bounds = array<i64: 8, 16>}, {pipeline_mode = #tpu.pipeline_mode<synchronous>, transform_indices = @transform_1, window_bounds = array<i64: 16, 32>}, {pipeline_mode = #tpu.pipeline_mode<synchronous>, transform_indices = @transform_2, window_bounds = array<i64: 1, 32>}, {pipeline_mode = #tpu.pipeline_mode<synchronous>, transform_indices = @transform_3, window_bounds = array<i64: 1, 32>}, {pipeline_mode = #tpu.pipeline_mode<synchronous>, transform_indices = @transform_4, window_bounds = array<i64: 1, 1>}, {transform_indices = @transform_5, window_bounds = array<i64: 8, 1>}]} {
    %c0 = arith.constant 0 : index
    %c0_0 = arith.constant 0 : index
    %0 = vector.load %arg1[%c0, %c0_0] : memref<8x16xbf16, #tpu.memory_space<vmem>>, vector<8x16xbf16>
    %c0_1 = arith.constant 0 : index
    %c0_2 = arith.constant 0 : index
    %1 = vector.load %arg2[%c0_1, %c0_2] : memref<16x32xbf16, #tpu.memory_space<vmem>>, vector<16x32xbf16>
    %cst = arith.constant dense<0.000000e+00> : vector<8x32xf32>
    %2 = tpu.matmul %0, %1, %cst {dimension_numbers = #tpu.dot_dimension_numbers<[1], [0], [0], [1], [0, 0, 1, 1], [], []>} : vector<8x16xbf16>, vector<16x32xbf16>, vector<8x32xf32> -> vector<8x32xf32>
    %c0_3 = arith.constant 0 : index
    %c0_4 = arith.constant 0 : index
    %3 = vector.load %arg3[%c0_3, %c0_4] : memref<1x32xf32, #tpu.memory_space<vmem>>, vector<1x32xf32>
    %4 = vector.broadcast %3 : vector<1x32xf32> to vector<8x32xf32>
    %5 = arith.addf %2, %4 : vector<8x32xf32>
    %cst_5 = arith.constant 0.000000e+00 : f32
    %6 = vector.broadcast %cst_5 : f32 to vector<8x32xf32>
    %7 = arith.maximumf %5, %6 : vector<8x32xf32>
    %c0_6 = arith.constant 0 : index
    %c0_7 = arith.constant 0 : index
    %8 = vector.load %arg4[%c0_6, %c0_7] : memref<1x32xf32, #tpu.memory_space<vmem>>, vector<1x32xf32>
    %9 = vector.broadcast %8 : vector<1x32xf32> to vector<8x32xf32>
    %10 = arith.mulf %7, %9 : vector<8x32xf32>
    %cst_8 = arith.constant dense<0.000000e+00> : vector<8xf32>
    %11 = vector.multi_reduction <add>, %10, %cst_8 [1] : vector<8x32xf32> to vector<8xf32>
    %12 = vector.shape_cast %11 : vector<8xf32> to vector<8x1xf32>
    %c0_9 = arith.constant 0 : index
    %c0_10 = arith.constant 0 : index
    %13 = vector.load %arg5[%c0_9, %c0_10] : memref<1x1xf32, #tpu.memory_space<vmem>>, vector<1x1xf32>
    %14 = vector.broadcast %13 : vector<1x1xf32> to vector<8x1xf32>
    %15 = arith.addf %12, %14 : vector<8x1xf32>
    %c0_11 = arith.constant 0 : index
    %c0_12 = arith.constant 0 : index
    %16 = vector.load %arg6[%c0_11, %c0_12] : memref<8x1xf32, #tpu.memory_space<vmem>>, vector<8x1xf32>
    tpu.vector_store %arg6[%c0_11, %c0_12], %15 {strides = array<i32>} : memref<8x1xf32, #tpu.memory_space<vmem>>, vector<8x1xf32>,
    return
  }
  func.func @transform_0(%arg0: i32) -> (i32, i32) {
    %c0_i32 = arith.constant 0 : i32
    %c0_i32_0 = arith.constant 0 : i32
    return %arg0, %c0_i32 : i32, i32
  }
  func.func @transform_1(%arg0: i32) -> (i32, i32) {
    %c0_i32 = arith.constant 0 : i32
    %c0_i32_0 = arith.constant 0 : i32
    %c0_i32_1 = arith.constant 0 : i32
    return %c0_i32, %c0_i32_0 : i32, i32
  }
  func.func @transform_2(%arg0: i32) -> (i32, i32) {
    %c0_i32 = arith.constant 0 : i32
    %c0_i32_0 = arith.constant 0 : i32
    %c0_i32_1 = arith.constant 0 : i32
    return %c0_i32, %c0_i32_0 : i32, i32
  }
  func.func @transform_3(%arg0: i32) -> (i32, i32) {
    %c0_i32 = arith.constant 0 : i32
    %c0_i32_0 = arith.constant 0 : i32
    %c0_i32_1 = arith.constant 0 : i32
    return %c0_i32, %c0_i32_0 : i32, i32
  }
  func.func @transform_4(%arg0: i32) -> (i32, i32) {
    %c0_i32 = arith.constant 0 : i32
    %c0_i32_0 = arith.constant 0 : i32
    %c0_i32_1 = arith.constant 0 : i32
    return %c0_i32, %c0_i32_0 : i32, i32
  }
  func.func @transform_5(%arg0: i32) -> (i32, i32) {
    %c0_i32 = arith.constant 0 : i32
    %c0_i32_0 = arith.constant 0 : i32
    return %arg0, %c0_i32 : i32, i32
  }
}

</mosaic_0001>

<llo_original>
// kernel: tpu_custom_call.1
$region0: #{tpu_custom_call.1}
  #allocation0 [shape = 'u32[]', space=smem, size = 0x4, offset = 0x4, fixed_abs, tag = 'smem constant byte address 0x4 - core index']
  #allocation1 [shape = 'u32[72,128]{1,0:T(1,128)}', space=vmem, size = 0x9000, scoped, tag = 'internal scratch']
  #allocation2 [shape = 'f32[1,1]{1,0:T(1,128)S(1)}', space=vmem, size = 0x200, scoped, tag = 'scoped memory for tpu_custom_call.1']
  %s0 = inlined_call_operand.hbm [shape: bf16[8,16], index: 0, kind: input, shape index: {}]
  %s1 = inlined_call_operand.hbm [shape: bf16[16,32], index: 1, kind: input, shape index: {}]
  %s2 = inlined_call_operand.vmem [shape: f32[1,32], index: 2, kind: input, shape index: {}]
  %s3 = inlined_call_operand.vmem [shape: f32[1,32], index: 3, kind: input, shape index: {}]
  %s4 = inlined_call_operand.<no memory space> [shape: f32[1,1], index: 4, kind: input, shape index: {}]
  %s5 = inlined_call_operand.vmem [shape: f32[8,1], index: 5, kind: output, shape index: {}]
  %s6 = sld [smem:[#allocation0]]
  $region38: #{tpu_custom_call.1} parent=0
    _
  %s8 = ssub.s32 1, %s6
  %s9 = scalar_select 0, %s8, %s6
  %v10 = vstv %s4
  %11 = vst [vmem:[#allocation2] sm:$0x1] %v10
  $region1: #{tpu_custom_call.1} parent=0
    #allocation3 [shape = 'u8[2048]{0}', space=vmem, size = 0x800, scoped, tag = 'input window, operand 0, single buffered']
    #allocation4 [shape = 's32[1]{0}', space=sflag, size = 0x4, scoped, tag = 'scoped memory for tpu_custom_call.1']
    #allocation5 [shape = 'u8[4096]{0}', space=vmem, size = 0x1000, scoped, tag = 'input window, operand 1, single buffered']
    #allocation6 [shape = 's32[1]{0}', space=sflag, size = 0x4, scoped, tag = 'scoped memory for tpu_custom_call.1']
    %12 = vsyncpa [#allocation4], 0
    %13 = vsyncpa [#allocation6], 0
    // Predicated region
    $region2: #{tpu_custom_call.1} parent=1 // pred_check
      _
    $region3: #{tpu_custom_call.1} parent=1 // pred_check_branch
      %15 = sbr.rel (0) target = $region5
    $region4: #{tpu_custom_call.1} parent=1 // pred_region
      %17 = vsyncadd [#allocation4], 0
      %s19 = sshll.u32 %s0, 4
      %s20 = int_to_ptr.hbm [resolvable:$true] %s19
      %s21 = sshll.u32 [#allocation3], 4
      %s22 = int_to_ptr.vmem [resolvable:$true] %s21
      %24 = dma.hbm_to_vmem [thread:$0]  %s20, 64, %s22, [#allocation4]
    $region5: #{tpu_custom_call.1} parent=1 // pred_fallthru
      _
    // Predicated region
    $region6: #{tpu_custom_call.1} parent=1 // pred_check
      _
    $region7: #{tpu_custom_call.1} parent=1 // pred_check_branch
      %26 = sbr.rel (0) target = $region9
    $region8: #{tpu_custom_call.1} parent=1 // pred_region
      %28 = vsyncadd [#allocation6], 0
      %s29 = sshll.u32 %s1, 4
      %s30 = int_to_ptr.hbm [resolvable:$true] %s29
      %s31 = sshll.u32 [#allocation5], 4
      %s32 = int_to_ptr.vmem [resolvable:$true] %s31
      %37 = dma.hbm_to_vmem [thread:$0]  %s30, 128, %s32, [#allocation6], 64, 64, 4
    $region9: #{tpu_custom_call.1} parent=1 // pred_fallthru
      _
    // Predicated region
    $region10: #{tpu_custom_call.1} parent=1 // pred_check
      _
    $region11: #{tpu_custom_call.1} parent=1 // pred_check_branch
      %39 = sbr.rel (0) target = $region13
    $region12: #{tpu_custom_call.1} parent=1 // pred_region
      _
    $region13: #{tpu_custom_call.1} parent=1 // pred_fallthru
      _
    // Predicated region
    $region14: #{tpu_custom_call.1} parent=1 // pred_check
      _
    $region15: #{tpu_custom_call.1} parent=1 // pred_check_branch
      %41 = sbr.rel (0) target = $region17
    $region16: #{tpu_custom_call.1} parent=1 // pred_region
      _
    $region17: #{tpu_custom_call.1} parent=1 // pred_fallthru
      _
    // Predicated region
    $region18: #{tpu_custom_call.1} parent=1 // pred_check
      _
    $region19: #{tpu_custom_call.1} parent=1 // pred_check_branch
      %43 = sbr.rel (0) target = $region21
    $region20: #{tpu_custom_call.1} parent=1 // pred_region
      _
    $region21: #{tpu_custom_call.1} parent=1 // pred_fallthru
      _
    // Predicated region
    $region22: #{tpu_custom_call.1} parent=1 // pred_check
      _
    $region23: #{tpu_custom_call.1} parent=1 // pred_check_branch
      %45 = sbr.rel (0) target = $region25
    $region24: #{tpu_custom_call.1} parent=1 // pred_region
      %47 = dma.done [#allocation4], 64
    $region25: #{tpu_custom_call.1} parent=1 // pred_fallthru
      _
    // Predicated region
    $region26: #{tpu_custom_call.1} parent=1 // pred_check
      _
    $region27: #{tpu_custom_call.1} parent=1 // pred_check_branch
      %49 = sbr.rel (0) target = $region29
    $region28: #{tpu_custom_call.1} parent=1 // pred_region
      %51 = dma.done [#allocation6], 128
    $region29: #{tpu_custom_call.1} parent=1 // pred_fallthru
      _
    %v53 = vld [vmem:[#allocation3] sm:$0xf]
    %v54 = vld [vmem:[#allocation5] sm:$0xf]
    %v55 = vld [vmem:[#allocation5 + $0x4] sm:$0xf]
    %v56 = vld [vmem:[%s2] sm:$0x1]
    %v58 = vperm.slane %v56, 0
    %v62 = vunpack.c.l.b16 %v54
    %v63 = vunpack.c.l.b16 %v55
    %v64 = vpack.c.b16 %v63, %v62
    %vm66 = vcmask 130048
    %v68 = vsel %vm66, %v53, 0
    %70 = vmatpush.bf16.msra.mxu0 0
    %71 = vmatpush.bf16.msra.mxu0 0
    %72 = vmatpush.bf16.msra.mxu0 0
    %73 = vmatpush.bf16.msra.mxu0 0
    %74 = vmatpush.bf16.msra.mxu0 0
    %75 = vmatpush.bf16.msra.mxu0 0
    %76 = vmatpush.bf16.msra.mxu0 0
    %77 = vmatpush.bf16.msra.mxu0 %v64
    %78 = vmatmul.bf16.gmra.mxu0 %v68
    %v79 = vpop.f32.mrf.mxu0
    %v80 = vadd.f32 %v58, %v79
    %v81 = vpop.f32.mrf.mxu0
    %82 = vdwg.mxu0
    %v83 = vmax.f32 %v80, 0.0
    %v84 = vld [vmem:[%s3] sm:$0x1]
    %v86 = vperm.slane %v84, 0
    %v88 = vmul.f32 %v83, %v86
    %vm89 = vcmask 261120
    %v90 = vsel %vm89, %v88, 0.0
    %91 = vadd.xlane.f32.xlu0 %v90
    %v92 = vpop.xlane.xlu0 %91
    %v93 = vld [vmem:[#allocation2] sm:$0x1]
    %v95 = vperm.slane %v93, 0
    %v97 = vadd.f32 %v92, %v95
    %vm98 = vcmask 7168
    %99 = vst.msk [vmem:[%s5] sm:$0xff] %vm98, %v97
    // Predicated region
    $region30: #{tpu_custom_call.1} parent=1 // pred_check
      _
    $region31: #{tpu_custom_call.1} parent=1 // pred_check_branch
      %101 = sbr.rel (0) target = $region33
    $region32: #{tpu_custom_call.1} parent=1 // pred_region
      _
    $region33: #{tpu_custom_call.1} parent=1 // pred_fallthru
      _
    // Predicated region
    $region34: #{tpu_custom_call.1} parent=1 // pred_check
      _
    $region35: #{tpu_custom_call.1} parent=1 // pred_check_branch
      %103 = sbr.rel (0) target = $region37
    $region36: #{tpu_custom_call.1} parent=1 // pred_region
      _
    $region37: #{tpu_custom_call.1} parent=1 // pred_fallthru
      _
    %104 = vsyncpa [#allocation4], 1
    %105 = vsyncpa [#allocation6], 1

</llo_original>
